<compile_context>
chip_gen: v7x
topology: tpu7x:2x2x1
jax: 0.10.0
libtpu: 0.0.40
codegen_flags: <defaults>
</compile_context>

<pallas_src>
import functools

import jax
import jax.numpy as jnp
from jax.experimental import pallas as pl
from jax.experimental.pallas import tpu as pltpu


def _filter_kernel(m_ref, x_ref, o_ref, *, tq):
    # m_ref: (H, H)  f32 shared circulant filter matrix (constant index_map ->
    #        fetched once, single-buffered).
    # x_ref: (TQ, H, TW) f32     o_ref: (TQ, H, TW) f32
    m = m_ref[...]
    for q in range(tq):  # static, bounded unroll; per-q (H,H)@(H,TW) MXU matmul
        o_ref[q] = jnp.dot(m, x_ref[q], preferred_element_type=jnp.float32)


def learnable_filter_matrix(filt):
    """Real (H, H) circulant matrix M with M @ v == Re(ifft(filt * fft(v)))."""
    H = filt.shape[0]
    g = jnp.real(jnp.fft.ifft(filt.astype(jnp.complex64))).astype(jnp.float32)
    idx = (jnp.arange(H)[:, None] - jnp.arange(H)[None, :]) % H
    return g[idx]


def _vmem_limit_bytes():
    # Per-generation scoped-VMEM budget: ~half of the 128 MiB on v5e/v6e,
    # ~3/4 of the 64 MiB on v7x.  Conservative 32 MiB if the query fails.
    try:
        cap = pltpu.get_tpu_info().vmem_capacity_bytes
    except Exception:
        return 32 * 1024 * 1024
    if cap >= 96 * 1024 * 1024:
        return 64 * 1024 * 1024
    return min(48 * 1024 * 1024, (cap * 3) // 4)


def learnable_filter_forward(x, filt, *, vmem_limit_bytes=None):
    """x: (B, C, H, W) float32, filt: (H,) float32 -> (B, C, H, W) float32."""
    B, C, H, W = x.shape
    BC = B * C
    x = x.astype(jnp.float32)

    M = learnable_filter_matrix(filt)      # (H, H) f32, built once (O(H^2))
    xr = x.reshape(BC, H, W)               # free view, no data movement

    if vmem_limit_bytes is None:
        vmem_limit_bytes = _vmem_limit_bytes()

    # VMEM budget: M is single-buffered; x/out blocks are double-buffered by
    # the pipeliner -> 2 buffers * 2 arrays * 4 B/elem.  Leave 2 MiB headroom.
    m_bytes = 4 * H * H
    budget = max(vmem_limit_bytes - m_bytes - (2 << 20), 1 << 20)

    def fits(tq, tw):
        return 16 * tq * H * tw <= budget

    # W tiling: keep the full row (TW = W) unless a single (1, H, W) block does
    # not fit, in which case tile W in multiples of 128 that divide W.
    TW = W
    if not fits(1, TW) and W % 128 == 0:
        TW = 128
        while W % (2 * TW) == 0 and fits(1, 2 * TW) and 2 * TW < W:
            TW *= 2
    # TODO(synk): ragged (non-multiple-of-128) W combined with huge H needs a
    # masked tail block; not required for the shapes exercised here.

    # TQ: largest divisor of B*C (capped at 8 -> bounded kernel unroll) that
    # fits the budget ...
    divs = [d for d in range(1, BC + 1) if BC % d == 0]
    TQ = max([d for d in divs if d <= 8 and fits(d, TW)] or [1])
    # ... then shrink so the 'parallel' grid has enough steps for both v7x
    # TensorCores and for DMA/compute overlap.
    while TQ > 1 and (BC // TQ) * (W // TW) < 8:
        TQ = max(d for d in divs if d < TQ)

    grid = (BC // TQ, W // TW)

    cost = pl.CostEstimate(
        flops=2 * H * H * BC * W,
        transcendentals=0,
        bytes_accessed=2 * 4 * BC * H * W + m_bytes,
    )

    out = pl.pallas_call(
        functools.partial(_filter_kernel, tq=TQ),
        out_shape=jax.ShapeDtypeStruct((BC, H, W), jnp.float32),
        grid_spec=pltpu.PrefetchScalarGridSpec(
            num_scalar_prefetch=0,
            grid=grid,
            in_specs=[
                # Shared (H, H) filter matrix: constant index_map -> one DMA;
                # single-buffered to halve its resident VMEM footprint.
                # TODO(synk): for very large H (f32 M >= ~16 MiB) add a
                # K-reduction grid axis ('arbitrary') with an f32 VMEM scratch
                # accumulator so v7x's 64 MiB VMEM keeps a healthy block size;
                # on v5e (compute-bound past H ~ 700) an int8-quantized path
                # would double MXU throughput.
                pl.BlockSpec((H, H), lambda i, j: (0, 0),
                             pipeline_mode=pl.Buffered(1)),
                # NCHW-native activation block: filtered axis H on sublanes,
                # W on lanes, straight from HBM (no transpose pass).  If
                # W < 128 the stores are masked; that penalty is still far
                # cheaper than the extra transpose/cast/pad HBM passes.
                pl.BlockSpec((TQ, H, TW), lambda i, j: (i, 0, j)),
            ],
            out_specs=pl.BlockSpec((TQ, H, TW), lambda i, j: (i, 0, j)),
        ),
        compiler_params=pltpu.CompilerParams(
            dimension_semantics=("parallel", "parallel"),
            vmem_limit_bytes=vmem_limit_bytes,
        ),
        cost_estimate=cost,
    )(M, xr)

    return out.reshape(B, C, H, W)  # free view back to NCHW


if __name__ == "__main__":
    B, C, H, W = 2, 4, 16, 16

    # Deterministic parameter init, exactly as the module's __init__:
    #   self.filter = nn.Parameter(2 * fftfreq(filter_size).abs().view(-1, 1))
    # (filter_size = H; forward broadcasts the same real scalar onto re/im.)
    filt = 2.0 * jnp.abs(jnp.fft.fftfreq(H)).astype(jnp.float32)

    key = jax.random.PRNGKey(0)
    x = jax.random.normal(key, (B, C, H, W), dtype=jnp.float32)

    fwd = jax.jit(learnable_filter_forward)
    y = jax.block_until_ready(fwd(x, filt))

    # Pure-JAX reference of the PyTorch semantics: full FFT along H, scale re
    # and im by the same real filter value, inverse FFT, real part.
    X = jnp.fft.fft(x.astype(jnp.complex64), axis=2)
    ref = jnp.real(jnp.fft.ifft(X * filt[None, None, :, None], axis=2)).astype(
        jnp.float32
    )

    assert y.shape == (B, C, H, W)
    max_err = float(jnp.max(jnp.abs(y - ref)))
    # f32 operands with f32 accumulation -> tight, f32-level tolerance.
    assert jnp.allclose(y, ref, rtol=1e-3, atol=1e-3), max_err
    print("KERNEL_OK")
</pallas_src>

<mosaic_0001>
module attributes {stable_mosaic.version = 11 : i64} {
  func.func @_filter_kernel(%arg0: i32, %arg1: i32, %arg2: memref<16x16xf32, #tpu.memory_space<vmem>>, %arg3: memref<1x16x16xf32, #tpu.memory_space<vmem>>, %arg4: memref<1x16x16xf32, #tpu.memory_space<vmem>>) attributes {dimension_semantics = [#tpu.dimension_semantics<parallel>, #tpu.dimension_semantics<parallel>], iteration_bounds = array<i64: 8, 1>, scalar_prefetch = 0 : i64, scratch_operands = 0 : i64, tpu.core_type = #tpu.core_type<tc>, window_params = [{pipeline_mode = #tpu.pipeline_mode<synchronous>, transform_indices = @transform_0, window_bounds = array<i64: 16, 16>}, {transform_indices = @transform_1, window_bounds = array<i64: 1, 16, 16>}, {transform_indices = @transform_2, window_bounds = array<i64: 1, 16, 16>}]} {
    %c0 = arith.constant 0 : index
    %c0_0 = arith.constant 0 : index
    %0 = vector.load %arg2[%c0, %c0_0] : memref<16x16xf32, #tpu.memory_space<vmem>>, vector<16x16xf32>
    %c0_1 = arith.constant 0 : index
    %c0_2 = arith.constant 0 : index
    %c0_3 = arith.constant 0 : index
    %1 = vector.load %arg3[%c0_1, %c0_2, %c0_3] : memref<1x16x16xf32, #tpu.memory_space<vmem>>, vector<1x16x16xf32>
    %2 = vector.shape_cast %1 : vector<1x16x16xf32> to vector<16x16xf32>
    %cst = arith.constant dense<0.000000e+00> : vector<16x16xf32>
    %3 = tpu.matmul %0, %2, %cst {dimension_numbers = #tpu.dot_dimension_numbers<[1], [0], [0], [1], [0, 0, 1, 1], [], []>} : vector<16x16xf32>, vector<16x16xf32>, vector<16x16xf32> -> vector<16x16xf32>
    %c0_4 = arith.constant 0 : index
    %c0_5 = arith.constant 0 : index
    %c0_6 = arith.constant 0 : index
    %4 = vector.load %arg4[%c0_4, %c0_5, %c0_6] : memref<1x16x16xf32, #tpu.memory_space<vmem>>, vector<1x16x16xf32>
    %5 = vector.shape_cast %4 : vector<1x16x16xf32> to vector<16x16xf32>
    %6 = vector.shape_cast %3 : vector<16x16xf32> to vector<1x16x16xf32>
    tpu.vector_store %arg4[%c0_4, %c0_5, %c0_6], %6 {strides = array<i32>} : memref<1x16x16xf32, #tpu.memory_space<vmem>>, vector<1x16x16xf32>,
    return
  }
  func.func @transform_0(%arg0: i32, %arg1: i32) -> (i32, i32) {
    %c0_i32 = arith.constant 0 : i32
    %c0_i32_0 = arith.constant 0 : i32
    %c0_i32_1 = arith.constant 0 : i32
    return %c0_i32, %c0_i32_0 : i32, i32
  }
  func.func @transform_1(%arg0: i32, %arg1: i32) -> (i32, i32, i32) {
    %c0_i32 = arith.constant 0 : i32
    %c0_i32_0 = arith.constant 0 : i32
    return %arg0, %c0_i32, %arg1 : i32, i32, i32
  }
  func.func @transform_2(%arg0: i32, %arg1: i32) -> (i32, i32, i32) {
    %c0_i32 = arith.constant 0 : i32
    %c0_i32_0 = arith.constant 0 : i32
    return %arg0, %c0_i32, %arg1 : i32, i32, i32
  }
}

</mosaic_0001>

<llo_original>
// kernel: learnable_filter_forward.1
$region0: #{learnable_filter_forward.1}
  #allocation0 [shape = 'u32[]', space=smem, size = 0x4, offset = 0x4, fixed_abs, tag = 'smem constant byte address 0x4 - core index']
  #allocation1 [shape = 'u32[144,128]{1,0:T(1,128)}', space=vmem, size = 0x12000, scoped, tag = 'internal scratch']
  %s0 = inlined_call_operand.vmem [shape: f32[16,16], index: 0, kind: input, shape index: {}]
  %s1 = inlined_call_operand.vmem [shape: f32[8,16,16], index: 1, kind: input, shape index: {}]
  %s2 = inlined_call_operand.hbm [shape: f32[8,16,16], index: 2, kind: output, shape index: {}]
  %s3 = sld [smem:[#allocation0]]
  $region41: #{learnable_filter_forward.1} parent=0
    _
  %s5 = ssub.s32 1, %s3
  %s6 = scalar_select 0, %s5, %s3
  $region1: #{learnable_filter_forward.1} parent=0
    #allocation2 [shape = 'u8[16384]{0}', space=vmem, size = 0x4000, scoped, tag = 'output window, operand 0']
    #allocation3 [shape = 's32[2]{0}', space=sflag, size = 0x8, scoped, tag = 'scoped memory for learnable_filter_forward.1']
    %7 = vsyncpa [#allocation3], 0
    %s8 = scalar_lea.sflag [#allocation3], 1
    %9 = vsyncpa %s8, 0
    loop: start=0, step=1, limit=10
    $region2: #{learnable_filter_forward.1} parent=1 // loop_pre_header
      _
    $region3: #{learnable_filter_forward.1} parent=1 // loop_header
      %s11 = sphi 0, %s15
      %p12 = scmp.ge.s32.totalorder %s11, 10
      %s18 = sphi 0, %s30
      %s19 = sphi 0, %s26
      %s20 = sphi 0, %s18
      %s21 = sphi 0, %s19
      %s22 = sphi 0, %s20
      %s23 = sphi 0, %s21
      %s31 = sphi 0, %s31
      %s33 = sphi 0, %s31
      %s34 = sphi 0, %s33
      %s48 = sphi 0, %s34
      %s56 = sphi 0, %s58
      %s59 = sphi 0, %s56
      %s60 = sphi 0, %s59
      %s76 = sphi 0, %s60
      %s84 = sphi 0, %s86
      %s87 = sphi 0, %s84
      %s88 = sphi 0, %s87
      %s104 = sphi 0, %s88
    $region4: #{learnable_filter_forward.1} parent=1 // loop_header_branch
      %14 = sbr.rel (%p12) target = $region8
    $region5: #{learnable_filter_forward.1} parent=1 // loop_body
      %s16 = ssub.s32 %s11, 1
      %s17 = ssub.s32 %s11, 2
      %s24 = sadd.s32 1, %s19
      %p25 = scmp.ge.s32.totalorder %s24, 1
      %s26 = scalar_select %p25, 0, %s24
      %s27 = sadd.s32 1, %s18
      %s28 = scalar_select %p25, %s27, %s18
      %p29 = scmp.ge.s32.totalorder %s28, 8
      %s30 = scalar_select %p29, 0, %s28
      %s32 = sadd.s32 %s31, 1
      %p35 = scmp.eq.s32.totalorder %s11, 7
      %p36 = scmp.ne.s32.totalorder %s31, %s33
      %p37 = scmp.eq.s32.totalorder %s11, 0
      %p38 = por %p36, %p37
      %p39 = scmp.ne.s32.totalorder %s31, %s33
      %p40 = scmp.eq.s32.totalorder %s16, 7
      %p41 = por %p39, %p40
      %p42 = scmp.ne.s32.totalorder %s33, %s34
      %p43 = scmp.eq.s32.totalorder %s16, 0
      %p44 = por %p42, %p43
      %p45 = scmp.ne.s32.totalorder %s33, %s34
      %p46 = scmp.eq.s32.totalorder %s17, 7
      %p47 = por %p45, %p46
      %p49 = scmp.ne.s32.totalorder %s34, %s48
      %p50 = scmp.eq.s32.totalorder %s17, 0
      %p51 = por %p49, %p50
      %s52 = ssub.s32 %s18, %s30
      %s53 = ssub.s32 %s19, %s26
      %s54 = sor.u32 %s52, %s53
      %p55 = scmp.eq.s32.totalorder %s54, 0
      %s57 = sadd.s32 %s56, 1
      %s58 = scalar_select %p55, %s56, %s57
      %p61 = pneg %p55
      %p62 = scmp.eq.s32.totalorder %s11, 7
      %p63 = por %p61, %p62
      %p64 = scmp.ne.s32.totalorder %s56, %s59
      %p65 = scmp.eq.s32.totalorder %s11, 0
      %p66 = por %p64, %p65
      %p67 = scmp.ne.s32.totalorder %s56, %s59
      %p68 = scmp.eq.s32.totalorder %s16, 7
      %p69 = por %p67, %p68
      %p70 = scmp.ne.s32.totalorder %s59, %s60
      %p71 = scmp.eq.s32.totalorder %s16, 0
      %p72 = por %p70, %p71
      %p73 = scmp.ne.s32.totalorder %s59, %s60
      %p74 = scmp.eq.s32.totalorder %s17, 7
      %p75 = por %p73, %p74
      %p77 = scmp.ne.s32.totalorder %s60, %s76
      %p78 = scmp.eq.s32.totalorder %s17, 0
      %p79 = por %p77, %p78
      %s80 = ssub.s32 %s18, %s30
      %s81 = ssub.s32 %s19, %s26
      %s82 = sor.u32 %s80, %s81
      %p83 = scmp.eq.s32.totalorder %s82, 0
      %s85 = sadd.s32 %s84, 1
      %s86 = scalar_select %p83, %s84, %s85
      %p89 = pneg %p83
      %p90 = scmp.eq.s32.totalorder %s11, 7
      %p91 = por %p89, %p90
      %p92 = scmp.ne.s32.totalorder %s84, %s87
      %p93 = scmp.eq.s32.totalorder %s11, 0
      %p94 = por %p92, %p93
      %p95 = scmp.ne.s32.totalorder %s84, %s87
      %p96 = scmp.eq.s32.totalorder %s16, 7
      %p97 = por %p95, %p96
      %p98 = scmp.ne.s32.totalorder %s87, %s88
      %p99 = scmp.eq.s32.totalorder %s16, 0
      %p100 = por %p98, %p99
      %p101 = scmp.ne.s32.totalorder %s87, %s88
      %p102 = scmp.eq.s32.totalorder %s17, 7
      %p103 = por %p101, %p102
      %p105 = scmp.ne.s32.totalorder %s88, %s104
      %p106 = scmp.eq.s32.totalorder %s17, 0
      %p107 = por %p105, %p106
      %p108 = scmp.le.s32.totalorder 1, %s11
      %p109 = scmp.lt.s32.totalorder %s11, 9
      %p110 = pnand %p108, %p109
      %p111 = pneg %p110
      // Predicated region
      $region9: #{learnable_filter_forward.1} parent=5 // pred_check
        _
      $region10: #{learnable_filter_forward.1} parent=5 // pred_check_branch
        %113 = sbr.rel (%p110) target = $region12
      $region11: #{learnable_filter_forward.1} parent=5 // pred_region
        %s114 = ssub.s32 %s11, 1
        // Predicated region
        $region13: #{learnable_filter_forward.1} parent=11 // pred_check
          %p115 = pneg %p44
        $region14: #{learnable_filter_forward.1} parent=11 // pred_check_branch
          %117 = sbr.rel (%p115) target = $region16
        $region15: #{learnable_filter_forward.1} parent=11 // pred_region
          _
        $region16: #{learnable_filter_forward.1} parent=11 // pred_fallthru
          _
      $region12: #{learnable_filter_forward.1} parent=5 // pred_fallthru
        _
      %p118 = scmp.lt.s32.totalorder %s11, 8
      // Predicated region
      $region17: #{learnable_filter_forward.1} parent=5 // pred_check
        %p119 = pneg %p118
      $region18: #{learnable_filter_forward.1} parent=5 // pred_check_branch
        %121 = sbr.rel (%p119) target = $region20
      $region19: #{learnable_filter_forward.1} parent=5 // pred_region
        // Predicated region
        $region21: #{learnable_filter_forward.1} parent=19 // pred_check
          %p122 = pneg %p66
        $region22: #{learnable_filter_forward.1} parent=19 // pred_check_branch
          %124 = sbr.rel (%p122) target = $region24
        $region23: #{learnable_filter_forward.1} parent=19 // pred_region
          %p125 = scmp.lt.s32.totalorder %s18, 7
          %s126 = scalar_select %p125, %s18, 7
          %p127 = scmp.lt.s32.totalorder %s19, 0
          %s128 = scalar_select %p127, %s19, 0
          %s129 = smul.addr %s126, 2
          %s130 = sadd.s32 %s128, %s129
          %s131 = smul.addr %s130, 8
          %s132 = scalar_lea.vmem %s1, %s131
        $region24: #{learnable_filter_forward.1} parent=19 // pred_fallthru
          _
      $region20: #{learnable_filter_forward.1} parent=5 // pred_fallthru
        _
      %p133 = scmp.le.s32.totalorder 1, %s11
      %p134 = scmp.lt.s32.totalorder %s11, 9
      %p135 = pnand %p133, %p134
      %p136 = pneg %p135
      // Predicated region
      $region25: #{learnable_filter_forward.1} parent=5 // pred_check
        _
      $region26: #{learnable_filter_forward.1} parent=5 // pred_check_branch
        %138 = sbr.rel (%p135) target = $region28
      $region27: #{learnable_filter_forward.1} parent=5 // pred_region
        %s139 = ssub.s32 %s11, 1
        %p140 = pneg %p44
        %p141 = pneg %p41
        %p142 = scmp.lt.s32.totalorder %s20, 7
        %s143 = scalar_select %p142, %s20, 7
        %p144 = scmp.lt.s32.totalorder %s21, 0
        %s145 = scalar_select %p144, %s21, 0
        %s146 = smul.addr %s143, 2
        %s147 = sadd.s32 %s145, %s146
        %s148 = smul.addr %s147, 8
        %s149 = scalar_lea.vmem %s1, %s148
        %p150 = pneg %p72
        %p151 = pneg %p69
        %p152 = pneg %p100
        %p153 = pneg %p97
        %s154 = sand.u32 %s87, 1
        %s155 = scalar_lea.sflag [#allocation3], %s154
        %s156 = sand.u32 %s87, 1
        %s157 = smul.addr %s156, 16
        %s158 = scalar_lea.vmem [#allocation2], %s157
        %p159 = scmp.lt.s32.totalorder %s20, 7
        %s160 = scalar_select %p159, %s20, 7
        %p161 = scmp.lt.s32.totalorder %s21, 0
        %s162 = scalar_select %p161, %s21, 0
        %s163 = smul.addr %s160, 2
        %s164 = sadd.s32 %s162, %s163
        %s165 = smul.addr %s164, 8
        %s166 = scalar_lea.vmem %s1, %s165
        %v167 = vld [vmem:[%s0] sm:$0xff]
        %v168 = vld [vmem:[%s0 + $0x8] sm:$0xff]
        %v169 = vld [vmem:[%s166] sm:$0xff]
        %v170 = vld [vmem:[%s166 + $0x8] sm:$0xff]
        %vm171 = vcmask 130048
        %v173 = vsel %vm171, %v167, 0
        %v176 = vsel %vm171, %v168, 0
        %178 = vmatprep.subr.mxu0 0.0
        %179 = vmatpush1.msra.mxu0 %v169
        %180 = vmatprep.subr.mxu0 0.0
        %181 = vmatpush1.msra.mxu0 %v170
        %182 = vmatprep.subr.mxu0 0.0
        %183 = vmatpush1.msra.mxu0 0.0
        %184 = vmatprep.subr.mxu0 0.0
        %185 = vmatpush1.msra.mxu0 0.0
        %186 = vmatprep.subr.mxu0 0.0
        %187 = vmatpush1.msra.mxu0 0.0
        %188 = vmatprep.subr.mxu0 0.0
        %189 = vmatpush1.msra.mxu0 0.0
        %190 = vmatprep.subr.mxu0 0.0
        %191 = vmatpush1.msra.mxu0 0.0
        %192 = vmatprep.subr.mxu0 0.0
        %193 = vmatpush1.msra.mxu0 0.0
        %194 = vmatprep.subr.mxu0 0.0
        %195 = vmatpush1.msra.mxu0 0.0
        %196 = vmatprep.subr.mxu0 0.0
        %197 = vmatpush1.msra.mxu0 0.0
        %198 = vmatprep.subr.mxu0 0.0
        %199 = vmatpush1.msra.mxu0 0.0
        %200 = vmatprep.subr.mxu0 0.0
        %201 = vmatpush1.msra.mxu0 0.0
        %202 = vmatprep.subr.mxu0 0.0
        %203 = vmatpush1.msra.mxu0 0.0
        %204 = vmatprep.subr.mxu0 0.0
        %205 = vmatpush1.msra.mxu0 0.0
        %206 = vmatprep.subr.mxu0 0.0
        %207 = vmatpush1.msra.mxu0 0.0
        %208 = vmatprep.subr.mxu0 0.0
        %209 = vmatpush1.msra.mxu0 0.0
        %210 = vmatprep.subr.mxu0 0.0
        %211 = vmatpush1.msra.mxu0 0.0
        %212 = vmatprep.subr.mxu0 0.0
        %213 = vmatpush1.msra.mxu0 0.0
        %214 = vmatprep.subr.mxu0 0.0
        %215 = vmatpush1.msra.mxu0 0.0
        %216 = vmatprep.subr.mxu0 0.0
        %217 = vmatpush1.msra.mxu0 0.0
        %218 = vmatprep.subr.mxu0 0.0
        %219 = vmatpush1.msra.mxu0 0.0
        %220 = vmatprep.subr.mxu0 0.0
        %221 = vmatpush1.msra.mxu0 0.0
        %222 = vmatprep.subr.mxu0 0.0
        %223 = vmatpush1.msra.mxu0 0.0
        %224 = vmatprep.subr.mxu0 0.0
        %225 = vmatpush1.msra.mxu0 0.0
        %226 = vmatprep.subr.mxu0 0.0
        %227 = vmatpush1.msra.mxu0 0.0
        %228 = vmatprep.subr.mxu0 0.0
        %229 = vmatpush1.msra.mxu0 0.0
        %230 = vmatprep.subr.mxu0 0.0
        %231 = vmatpush1.msra.mxu0 0.0
        %232 = vmatprep.subr.mxu0 0.0
        %233 = vmatpush1.msra.mxu0 0.0
        %234 = vmatprep.subr.mxu0 0.0
        %235 = vmatpush1.msra.mxu0 0.0
        %236 = vmatprep.subr.mxu0 0.0
        %237 = vmatpush1.msra.mxu0 0.0
        %238 = vmatprep.subr.mxu0 0.0
        %239 = vmatpush1.msra.mxu0 0.0
        %240 = vmatprep.subr.mxu0 0.0
        %241 = vmatpush1.msra.mxu0 0.0
        %242 = vmatprep.mubr.f32.mxu0 0.0
        %243 = vmatmul.mubr.f32.gmra.mrb[0].mxu0 %v173
        %v244 = vpop.f32.mrb[0].mxu0
        %v245 = vadd.f32 0.0, %v244
        %v246 = vpop.f32.mrb[0].mxu0
        %247 = vmatprep.mubr.f32.mxu0 0.0
        %248 = vmatmul.mubr.f32.gmra.mrb[0].mxu0 %v176
        %v249 = vpop.f32.mrb[0].mxu0
        %v250 = vadd.f32 0.0, %v249
        %v251 = vpop.f32.mrb[0].mxu0
        %252 = vdwg.mxu0
        %253 = vst.msk [vmem:[%s158] sm:$0xff] %vm171, %v245
        %254 = vst.msk [vmem:[%s158 + $0x8] sm:$0xff] %vm171, %v250
        %s255 = sand.u32 %s87, 1
        %s256 = scalar_lea.sflag [#allocation3], %s255
        %s257 = sand.u32 %s87, 1
        %s258 = smul.addr %s257, 16
        %s259 = scalar_lea.vmem [#allocation2], %s258
        // Predicated region
        $region29: #{learnable_filter_forward.1} parent=27 // pred_check
          %p260 = pneg %p97
        $region30: #{learnable_filter_forward.1} parent=27 // pred_check_branch
          %262 = sbr.rel (%p260) target = $region32
        $region31: #{learnable_filter_forward.1} parent=27 // pred_region
          %s264 = ssub.s32 256, 256
          %265 = vsyncadd %s256, %s264
          %s266 = smul.addr %s20, 2
          %s267 = sadd.s32 %s21, %s266
          %s268 = smul.addr %s267, 128
          %s269 = scalar_lea.hbm %s2, %s268
          %s270 = sshll.u32 %s259, 4
          %s271 = int_to_ptr.vmem [resolvable:$true] %s270
          %276 = dma.vmem_to_hbm [thread:$0]  %s271, 256, %s269, %s256, 128, 128, 8
        $region32: #{learnable_filter_forward.1} parent=27 // pred_fallthru
          _
      $region28: #{learnable_filter_forward.1} parent=5 // pred_fallthru
        _
      %p277 = scmp.le.s32.totalorder 2, %s11
      // Predicated region
      $region33: #{learnable_filter_forward.1} parent=5 // pred_check
        %p278 = pneg %p277
      $region34: #{learnable_filter_forward.1} parent=5 // pred_check_branch
        %280 = sbr.rel (%p278) target = $region36
      $region35: #{learnable_filter_forward.1} parent=5 // pred_region
        %s281 = ssub.s32 %s11, 2
        // Predicated region
        $region37: #{learnable_filter_forward.1} parent=35 // pred_check
          %p282 = pneg %p103
        $region38: #{learnable_filter_forward.1} parent=35 // pred_check_branch
          %284 = sbr.rel (%p282) target = $region40
        $region39: #{learnable_filter_forward.1} parent=35 // pred_region
          %s285 = sand.u32 %s88, 1
          %s286 = scalar_lea.sflag [#allocation3], %s285
          %s287 = sand.u32 %s88, 1
          %s288 = smul.addr %s287, 16
          %s289 = scalar_lea.vmem [#allocation2], %s288
          %290 = dma.done %s286, 256
        $region40: #{learnable_filter_forward.1} parent=35 // pred_fallthru
          _
      $region36: #{learnable_filter_forward.1} parent=5 // pred_fallthru
        _
    $region6: #{learnable_filter_forward.1} parent=1 // loop_footer
      %s15 = sadd.s32 1, %s11
    $region7: #{learnable_filter_forward.1} parent=1 // loop_footer_branch
      %10 = sbr.rel target = $region3
    $region8: #{learnable_filter_forward.1} parent=1 // loop_exit
      _
    %291 = vsyncpa [#allocation3], 1
    %s292 = scalar_lea.sflag [#allocation3], 1
    %293 = vsyncpa %s292, 1

</llo_original>
